<compile_context>
chip_gen: v7x
topology: tpu7x:2x2x1
jax: 0.10.0
libtpu: 0.0.40
codegen_flags: <defaults>
</compile_context>

<pallas_src>
import functools

import jax
import jax.numpy as jnp
from jax.experimental import pallas as pl
from jax.experimental.pallas import tpu as pltpu


# ----------------------------- fused Pallas kernel -----------------------------

def fused_gnn_kernel(alpha_ref, a_ref, x0_ref, w_ref, b_ref, p_ref, lw_ref, lb_ref,
                     o_ref, x_sc, *, num_classes):
    layer = pl.program_id(0)
    n_layers = pl.num_programs(0)

    # Load the initial node features into the resident VMEM scratch on the first step.
    @pl.when(layer == 0)
    def _():
        x_sc[...] = x0_ref[...]

    # GCN layer: A_hat @ (x @ W) + b, bf16 MXU inputs, f32 accumulation.
    xw = jnp.dot(x_sc[...].astype(jnp.bfloat16), w_ref[0],
                 preferred_element_type=jnp.float32)
    h = jnp.dot(a_ref[...], xw.astype(jnp.bfloat16),
                preferred_element_type=jnp.float32) + b_ref[0]

    # PReLU with per-layer alpha from SMEM (alpha == 1.0 on the last layer -> identity).
    alpha = alpha_ref[layer]
    x_sc[...] = jnp.where(h >= 0.0, h, alpha * h)

    # Epilogue on the final layer: mean-pool, linear head, masked log_softmax.
    @pl.when(layer == n_layers - 1)
    def _():
        pooled = jnp.dot(p_ref[...], x_sc[...], preferred_element_type=jnp.float32)
        logits = jnp.dot(pooled, lw_ref[...], preferred_element_type=jnp.float32) + lb_ref[...]
        col = jax.lax.broadcasted_iota(jnp.int32, logits.shape, 1)
        logits = jnp.where(col < num_classes, logits, jnp.float32(-1e30))
        m = jnp.max(logits, axis=1, keepdims=True)
        s = logits - m
        lse = jnp.log(jnp.sum(jnp.exp(s), axis=1, keepdims=True))
        o_ref[...] = s - lse


# ----------------------------- wrapper -----------------------------

def _round_up(x, m):
    return ((x + m - 1) // m) * m


def _pad2(x, shape):
    pads = [(0, s - d) for d, s in zip(x.shape, shape)]
    return jnp.pad(x, pads)


def gnn_forward(params, a_hat, pool_mat, x):
    num_layers = len(params["conv_w"])
    n, f = x.shape
    g = pool_mat.shape[0]
    c = params["lin_b"].shape[0]

    # Lane/sublane-friendly padded shapes.
    f_pad = _round_up(f, 128)       # hidden features -> 128 lanes
    c_pad = _round_up(c, 128)       # classes -> 128 lanes (unmasked vst on the output)
    n_pad = _round_up(n, 128)       # nodes (lane dim of A_hat) -> 128
    g_pad = _round_up(g, 8)         # graphs -> 8 sublanes

    # Pad + cast once (bf16 for the big MXU operands, f32 for the numeric tail).
    a_p = _pad2(a_hat, (n_pad, n_pad)).astype(jnp.bfloat16)
    x_p = _pad2(x, (n_pad, f_pad)).astype(jnp.float32)
    w_stack = jnp.stack(
        [_pad2(w, (f_pad, f_pad)) for w in params["conv_w"]]).astype(jnp.bfloat16)
    b_stack = jnp.stack(
        [_pad2(b[None, :], (1, f_pad)) for b in params["conv_b"]]).astype(jnp.float32)
    p_p = _pad2(pool_mat, (g_pad, n_pad)).astype(jnp.float32)
    lw_p = _pad2(params["lin_w_t"], (f_pad, c_pad)).astype(jnp.float32)
    lb_p = _pad2(params["lin_b"][None, :], (1, c_pad)).astype(jnp.float32)

    # Per-layer PReLU alphas, last entry 1.0 so the final conv has no activation.
    alphas = jnp.concatenate(
        [jnp.asarray(params["prelu_alpha"], jnp.float32).reshape(-1),
         jnp.ones((1,), jnp.float32)])

    flops = int(num_layers * (2 * n_pad * f_pad * f_pad + 2 * n_pad * n_pad * f_pad)
                + 2 * g_pad * n_pad * f_pad + 2 * g_pad * f_pad * c_pad)
    transcendentals = int(g_pad * c_pad)
    bytes_accessed = int(a_p.size * 2 + x_p.size * 4 + w_stack.size * 2 + b_stack.size * 4
                         + p_p.size * 4 + lw_p.size * 4 + lb_p.size * 4 + g_pad * c_pad * 4)

    kernel = functools.partial(fused_gnn_kernel, num_classes=c)

    out_pad = pl.pallas_call(
        kernel,
        out_shape=jax.ShapeDtypeStruct((g_pad, c_pad), jnp.float32),
        grid_spec=pltpu.PrefetchScalarGridSpec(
            num_scalar_prefetch=0,
            grid=(num_layers,),
            in_specs=[
                # PReLU alphas: tiny scalar table in SMEM, read on the scalar path.
                pl.BlockSpec(memory_space=pltpu.MemorySpace.SMEM),
                # Resident operands (constant block index -> DMA'd once, reused every layer).
                pl.BlockSpec((n_pad, n_pad), lambda l: (0, 0)),       # A_hat (bf16)
                pl.BlockSpec((n_pad, f_pad), lambda l: (0, 0)),       # x0 (f32)
                # Pipelined per-layer weights/bias.
                pl.BlockSpec((1, f_pad, f_pad), lambda l: (l, 0, 0)),  # conv W stack (bf16)
                pl.BlockSpec((1, 1, f_pad), lambda l: (l, 0, 0)),      # conv b stack (f32)
                # Head operands (resident, used only in the last step's epilogue).
                pl.BlockSpec((g_pad, n_pad), lambda l: (0, 0)),       # pooling matrix
                pl.BlockSpec((f_pad, c_pad), lambda l: (0, 0)),       # lin W^T
                pl.BlockSpec((1, c_pad), lambda l: (0, 0)),           # lin b
            ],
            out_specs=pl.BlockSpec((g_pad, c_pad), lambda l: (0, 0)),
            scratch_shapes=[pltpu.VMEM((n_pad, f_pad), jnp.float32)],  # running node features
        ),
        compiler_params=pltpu.CompilerParams(
            dimension_semantics=("arbitrary",),   # layer axis carries state -> sequential
        ),
        cost_estimate=pl.CostEstimate(
            flops=flops, transcendentals=transcendentals, bytes_accessed=bytes_accessed),
    )(alphas, a_p, x_p, w_stack, b_stack, p_p, lw_p, lb_p)

    return out_pad[:g, :c]


# ----------------------------- reference (plain JAX, f32) -----------------------------

def reference_forward(params, a_hat, pool_mat, x):
    num_layers = len(params["conv_w"])
    for layer in range(num_layers):
        x = a_hat @ (x @ params["conv_w"][layer]) + params["conv_b"][layer][None, :]
        if layer < num_layers - 1:
            alpha = params["prelu_alpha"][layer]
            x = jnp.where(x >= 0, x, alpha * x)
    pooled = pool_mat @ x
    logits = pooled @ params["lin_w_t"] + params["lin_b"][None, :]
    return jax.nn.log_softmax(logits, axis=1)


# ----------------------------- glue (plain JAX) -----------------------------

def normalized_adjacency(edge_index, num_nodes):
    # GCN normalization: D^{-1/2} (A + I) D^{-1/2}, symmetric edges.
    src, dst = edge_index
    a = jnp.zeros((num_nodes, num_nodes), jnp.float32)
    a = a.at[src, dst].set(1.0)
    a = a.at[dst, src].set(1.0)
    a = jnp.maximum(a, jnp.eye(num_nodes, dtype=jnp.float32))
    deg = jnp.sum(a, axis=1)
    d_inv_sqrt = 1.0 / jnp.sqrt(deg)
    return a * d_inv_sqrt[:, None] * d_inv_sqrt[None, :]


def mean_pool_matrix(batch, num_graphs):
    onehot = (batch[None, :] == jnp.arange(num_graphs)[:, None]).astype(jnp.float32)
    counts = jnp.sum(onehot, axis=1, keepdims=True)
    return onehot / jnp.maximum(counts, 1.0)


def init_params(key, hidden_dim, output_dim, num_layers):
    keys = jax.random.split(key, 2 * num_layers + 2)
    conv_w, conv_b = [], []
    for l in range(num_layers):
        conv_w.append(0.1 * jax.random.normal(keys[2 * l], (hidden_dim, hidden_dim), jnp.float32))
        conv_b.append(0.01 * jax.random.normal(keys[2 * l + 1], (hidden_dim,), jnp.float32))
    lin_w = 0.1 * jax.random.normal(keys[-2], (output_dim, hidden_dim), jnp.float32)
    lin_b = 0.01 * jax.random.normal(keys[-1], (output_dim,), jnp.float32)
    return {
        "conv_w": conv_w,
        "conv_b": conv_b,
        "prelu_alpha": [jnp.float32(0.25) for _ in range(num_layers - 1)],  # PReLU default init
        "lin_w_t": lin_w.T,   # pass transposed so head does pooled @ W^T
        "lin_b": lin_b,
    }


# ----------------------------- main -----------------------------

if __name__ == "__main__":
    hidden_dim = 32
    output_dim = 8
    num_layers = 3
    num_nodes = 16
    num_graphs = 2

    key = jax.random.PRNGKey(0)
    k_x, k_p = jax.random.split(key)

    # node features (N, hidden_dim)
    x = jax.random.normal(k_x, (num_nodes, hidden_dim), jnp.float32)

    # two graphs of 8 nodes each: ring edges within each graph + one chord each
    src = jnp.array([0, 1, 2, 3, 4, 5, 6, 7, 0, 8, 9, 10, 11, 12, 13, 14, 15, 8],
                    dtype=jnp.int32)
    dst = jnp.array([1, 2, 3, 4, 5, 6, 7, 0, 4, 9, 10, 11, 12, 13, 14, 15, 8, 12],
                    dtype=jnp.int32)
    edge_index = jnp.stack([src, dst], axis=0)

    batch = jnp.concatenate([jnp.zeros(8, jnp.int32), jnp.ones(8, jnp.int32)])

    a_hat = normalized_adjacency(edge_index, num_nodes)
    pool_mat = mean_pool_matrix(batch, num_graphs)
    params = init_params(k_p, hidden_dim, output_dim, num_layers)

    out = gnn_forward(params, a_hat, pool_mat, x)
    out = jax.block_until_ready(out)

    assert out.shape == (num_graphs, output_dim)
    # rows of log_softmax should exp-sum to ~1
    assert bool(jnp.all(jnp.abs(jnp.sum(jnp.exp(out), axis=1) - 1.0) < 1e-4))
    # compare against an f32 pure-JAX reference (loose tolerance: A_hat/W go through bf16 MXU)
    ref = reference_forward(params, a_hat, pool_mat, x)
    assert bool(jnp.max(jnp.abs(out - ref)) < 5e-2)
    print("KERNEL_OK")
</pallas_src>

<mosaic_0001>
module attributes {stable_mosaic.version = 11 : i64} {
  func.func @fused_gnn_kernel(%arg0: i32, %arg1: memref<3xf32, #tpu.memory_space<smem>>, %arg2: memref<128x128xbf16, #tpu.memory_space<vmem>>, %arg3: memref<128x128xf32, #tpu.memory_space<vmem>>, %arg4: memref<1x128x128xbf16, #tpu.memory_space<vmem>>, %arg5: memref<1x1x128xf32, #tpu.memory_space<vmem>>, %arg6: memref<8x128xf32, #tpu.memory_space<vmem>>, %arg7: memref<128x128xf32, #tpu.memory_space<vmem>>, %arg8: memref<1x128xf32, #tpu.memory_space<vmem>>, %arg9: memref<8x128xf32, #tpu.memory_space<vmem>>, %arg10: memref<128x128xf32, #tpu.memory_space<vmem>>) attributes {dimension_semantics = [#tpu.dimension_semantics<arbitrary>], iteration_bounds = array<i64: 3>, scalar_prefetch = 0 : i64, scratch_operands = 1 : i64, tpu.core_type = #tpu.core_type<tc>, window_params = [{transform_indices = @transform_0, window_bounds = array<i64: 3>}, {pipeline_mode = #tpu.pipeline_mode<synchronous>, transform_indices = @transform_1, window_bounds = array<i64: 128, 128>}, {pipeline_mode = #tpu.pipeline_mode<synchronous>, transform_indices = @transform_2, window_bounds = array<i64: 128, 128>}, {transform_indices = @transform_3, window_bounds = array<i64: 1, 128, 128>}, {transform_indices = @transform_4, window_bounds = array<i64: 1, 1, 128>}, {pipeline_mode = #tpu.pipeline_mode<synchronous>, transform_indices = @transform_5, window_bounds = array<i64: 8, 128>}, {pipeline_mode = #tpu.pipeline_mode<synchronous>, transform_indices = @transform_6, window_bounds = array<i64: 128, 128>}, {pipeline_mode = #tpu.pipeline_mode<synchronous>, transform_indices = @transform_7, window_bounds = array<i64: 1, 128>}, {pipeline_mode = #tpu.pipeline_mode<synchronous>, transform_indices = @transform_8, window_bounds = array<i64: 8, 128>}]} {
    %c0_i32 = arith.constant 0 : i32
    %0 = arith.cmpi eq, %arg0, %c0_i32 : i32
    %1 = arith.extui %0 : i1 to i32
    %c0_i32_0 = arith.constant 0 : i32
    %2 = arith.cmpi ne, %1, %c0_i32_0 : i32
    scf.if %2 {
      %c0_15 = arith.constant 0 : index
      %c0_16 = arith.constant 0 : index
      %26 = vector.load %arg3[%c0_15, %c0_16] : memref<128x128xf32, #tpu.memory_space<vmem>>, vector<128x128xf32>
      %c0_17 = arith.constant 0 : index
      %c0_18 = arith.constant 0 : index
      %27 = vector.load %arg10[%c0_17, %c0_18] : memref<128x128xf32, #tpu.memory_space<vmem>>, vector<128x128xf32>
      tpu.vector_store %arg10[%c0_17, %c0_18], %26 {strides = array<i32>} : memref<128x128xf32, #tpu.memory_space<vmem>>, vector<128x128xf32>,
    } else {
    }
    %c0 = arith.constant 0 : index
    %c0_1 = arith.constant 0 : index
    %3 = vector.load %arg10[%c0, %c0_1] : memref<128x128xf32, #tpu.memory_space<vmem>>, vector<128x128xf32>
    %4 = arith.truncf %3 : vector<128x128xf32> to vector<128x128xbf16>
    %c0_2 = arith.constant 0 : index
    %c0_3 = arith.constant 0 : index
    %c0_4 = arith.constant 0 : index
    %5 = vector.load %arg4[%c0_2, %c0_3, %c0_4] : memref<1x128x128xbf16, #tpu.memory_space<vmem>>, vector<1x128x128xbf16>
    %6 = vector.shape_cast %5 : vector<1x128x128xbf16> to vector<128x128xbf16>
    %cst = arith.constant dense<0.000000e+00> : vector<128x128xf32>
    %7 = tpu.matmul %4, %6, %cst {dimension_numbers = #tpu.dot_dimension_numbers<[1], [0], [0], [1], [0, 0, 1, 1], [], []>} : vector<128x128xbf16>, vector<128x128xbf16>, vector<128x128xf32> -> vector<128x128xf32>
    %c0_5 = arith.constant 0 : index
    %c0_6 = arith.constant 0 : index
    %8 = vector.load %arg2[%c0_5, %c0_6] : memref<128x128xbf16, #tpu.memory_space<vmem>>, vector<128x128xbf16>
    %9 = arith.truncf %7 : vector<128x128xf32> to vector<128x128xbf16>
    %cst_7 = arith.constant dense<0.000000e+00> : vector<128x128xf32>
    %10 = tpu.matmul %8, %9, %cst_7 {dimension_numbers = #tpu.dot_dimension_numbers<[1], [0], [0], [1], [0, 0, 1, 1], [], []>} : vector<128x128xbf16>, vector<128x128xbf16>, vector<128x128xf32> -> vector<128x128xf32>
    %c0_8 = arith.constant 0 : index
    %c0_9 = arith.constant 0 : index
    %c0_10 = arith.constant 0 : index
    %11 = vector.load %arg5[%c0_8, %c0_9, %c0_10] : memref<1x1x128xf32, #tpu.memory_space<vmem>>, vector<1x1x128xf32>
    %12 = vector.shape_cast %11 : vector<1x1x128xf32> to vector<1x128xf32>
    %13 = vector.broadcast %12 : vector<1x128xf32> to vector<128x128xf32>
    %14 = arith.addf %10, %13 : vector<128x128xf32>
    %15 = arith.index_cast %arg0 : i32 to index
    %16 = memref.load %arg1[%15] : memref<3xf32, #tpu.memory_space<smem>>
    %cst_11 = arith.constant 0.000000e+00 : f32
    %17 = vector.broadcast %cst_11 : f32 to vector<128x128xf32>
    %18 = arith.cmpf oge, %14, %17 : vector<128x128xf32>
    %19 = vector.broadcast %16 : f32 to vector<128x128xf32>
    %20 = arith.mulf %19, %14 : vector<128x128xf32>
    %21 = arith.select %18, %14, %20 : vector<128x128xi1>, vector<128x128xf32>
    %c0_12 = arith.constant 0 : index
    %c0_13 = arith.constant 0 : index
    %22 = vector.load %arg10[%c0_12, %c0_13] : memref<128x128xf32, #tpu.memory_space<vmem>>, vector<128x128xf32>
    tpu.vector_store %arg10[%c0_12, %c0_13], %21 {strides = array<i32>} : memref<128x128xf32, #tpu.memory_space<vmem>>, vector<128x128xf32>,
    %c2_i32 = arith.constant 2 : i32
    %23 = arith.cmpi eq, %arg0, %c2_i32 : i32
    %24 = arith.extui %23 : i1 to i32
    %c0_i32_14 = arith.constant 0 : i32
    %25 = arith.cmpi ne, %24, %c0_i32_14 : i32
    scf.if %25 {
      %c0_15 = arith.constant 0 : index
      %c0_16 = arith.constant 0 : index
      %26 = vector.load %arg6[%c0_15, %c0_16] : memref<8x128xf32, #tpu.memory_space<vmem>>, vector<8x128xf32>
      %c0_17 = arith.constant 0 : index
      %c0_18 = arith.constant 0 : index
      %27 = vector.load %arg10[%c0_17, %c0_18] : memref<128x128xf32, #tpu.memory_space<vmem>>, vector<128x128xf32>
      %cst_19 = arith.constant dense<0.000000e+00> : vector<8x128xf32>
      %28 = tpu.matmul %26, %27, %cst_19 {dimension_numbers = #tpu.dot_dimension_numbers<[1], [0], [0], [1], [0, 0, 1, 1], [], []>} : vector<8x128xf32>, vector<128x128xf32>, vector<8x128xf32> -> vector<8x128xf32>
      %c0_20 = arith.constant 0 : index
      %c0_21 = arith.constant 0 : index
      %29 = vector.load %arg7[%c0_20, %c0_21] : memref<128x128xf32, #tpu.memory_space<vmem>>, vector<128x128xf32>
      %cst_22 = arith.constant dense<0.000000e+00> : vector<8x128xf32>
      %30 = tpu.matmul %28, %29, %cst_22 {dimension_numbers = #tpu.dot_dimension_numbers<[1], [0], [0], [1], [0, 0, 1, 1], [], []>} : vector<8x128xf32>, vector<128x128xf32>, vector<8x128xf32> -> vector<8x128xf32>
      %c0_23 = arith.constant 0 : index
      %c0_24 = arith.constant 0 : index
      %31 = vector.load %arg8[%c0_23, %c0_24] : memref<1x128xf32, #tpu.memory_space<vmem>>, vector<1x128xf32>
      %32 = vector.broadcast %31 : vector<1x128xf32> to vector<8x128xf32>
      %33 = arith.addf %30, %32 : vector<8x128xf32>
      %34 = tpu.iota {dimensions = array<i32: 1>} : vector<8x128xi32>
      %c8_i32 = arith.constant 8 : i32
      %35 = vector.broadcast %c8_i32 : i32 to vector<8x128xi32>
      %36 = arith.cmpi slt, %34, %35 : vector<8x128xi32>
      %cst_25 = arith.constant -1.000000e+30 : f32
      %37 = vector.broadcast %cst_25 : f32 to vector<8x128xf32>
      %38 = arith.select %36, %33, %37 : vector<8x128xi1>, vector<8x128xf32>
      %cst_26 = arith.constant dense<0xFF800000> : vector<8xf32>
      %39 = vector.multi_reduction <maximumf>, %38, %cst_26 [1] : vector<8x128xf32> to vector<8xf32>
      %40 = vector.shape_cast %39 : vector<8xf32> to vector<8x1xf32>
      %41 = vector.broadcast %40 : vector<8x1xf32> to vector<8x128xf32>
      %42 = arith.subf %38, %41 : vector<8x128xf32>
      %43 = math.exp %42 : vector<8x128xf32>
      %cst_27 = arith.constant dense<0.000000e+00> : vector<8xf32>
      %44 = vector.multi_reduction <add>, %43, %cst_27 [1] : vector<8x128xf32> to vector<8xf32>
      %45 = vector.shape_cast %44 : vector<8xf32> to vector<8x1xf32>
      %46 = math.log %45 : vector<8x1xf32>
      %47 = vector.broadcast %46 : vector<8x1xf32> to vector<8x128xf32>
      %48 = arith.subf %42, %47 : vector<8x128xf32>
      %c0_28 = arith.constant 0 : index
      %c0_29 = arith.constant 0 : index
      %49 = vector.load %arg9[%c0_28, %c0_29] : memref<8x128xf32, #tpu.memory_space<vmem>>, vector<8x128xf32>
      tpu.vector_store %arg9[%c0_28, %c0_29], %48 {strides = array<i32>} : memref<8x128xf32, #tpu.memory_space<vmem>>, vector<8x128xf32>,
    } else {
    }
    return
  }
  func.func @transform_0(%arg0: i32) -> i32 {
    %c0_i32 = arith.constant 0 : i32
    %c0_i32_0 = arith.constant 0 : i32
    return %c0_i32 : i32
  }
  func.func @transform_1(%arg0: i32) -> (i32, i32) {
    %c0_i32 = arith.constant 0 : i32
    %c0_i32_0 = arith.constant 0 : i32
    %c0_i32_1 = arith.constant 0 : i32
    return %c0_i32, %c0_i32_0 : i32, i32
  }
  func.func @transform_2(%arg0: i32) -> (i32, i32) {
    %c0_i32 = arith.constant 0 : i32
    %c0_i32_0 = arith.constant 0 : i32
    %c0_i32_1 = arith.constant 0 : i32
    return %c0_i32, %c0_i32_0 : i32, i32
  }
  func.func @transform_3(%arg0: i32) -> (i32, i32, i32) {
    %c0_i32 = arith.constant 0 : i32
    %c0_i32_0 = arith.constant 0 : i32
    %c0_i32_1 = arith.constant 0 : i32
    return %arg0, %c0_i32, %c0_i32_0 : i32, i32, i32
  }
  func.func @transform_4(%arg0: i32) -> (i32, i32, i32) {
    %c0_i32 = arith.constant 0 : i32
    %c0_i32_0 = arith.constant 0 : i32
    %c0_i32_1 = arith.constant 0 : i32
    return %arg0, %c0_i32, %c0_i32_0 : i32, i32, i32
  }
  func.func @transform_5(%arg0: i32) -> (i32, i32) {
    %c0_i32 = arith.constant 0 : i32
    %c0_i32_0 = arith.constant 0 : i32
    %c0_i32_1 = arith.constant 0 : i32
    return %c0_i32, %c0_i32_0 : i32, i32
  }
  func.func @transform_6(%arg0: i32) -> (i32, i32) {
    %c0_i32 = arith.constant 0 : i32
    %c0_i32_0 = arith.constant 0 : i32
    %c0_i32_1 = arith.constant 0 : i32
    return %c0_i32, %c0_i32_0 : i32, i32
  }
  func.func @transform_7(%arg0: i32) -> (i32, i32) {
    %c0_i32 = arith.constant 0 : i32
    %c0_i32_0 = arith.constant 0 : i32
    %c0_i32_1 = arith.constant 0 : i32
    return %c0_i32, %c0_i32_0 : i32, i32
  }
  func.func @transform_8(%arg0: i32) -> (i32, i32) {
    %c0_i32 = arith.constant 0 : i32
    %c0_i32_0 = arith.constant 0 : i32
    %c0_i32_1 = arith.constant 0 : i32
    return %c0_i32, %c0_i32_0 : i32, i32
  }
}

</mosaic_0001>

<llo_original>
// kernel: tpu_custom_call.1
$region0: #{tpu_custom_call.1}
  #allocation0 [shape = 'u32[]', space=smem, size = 0x4, offset = 0x4, fixed_abs, tag = 'smem constant byte address 0x4 - core index']
  #allocation1 [shape = 'u32[144,128]{1,0:T(1,128)}', space=vmem, size = 0x12000, scoped, tag = 'internal scratch']
  #allocation2 [shape = 'f32[128,128]{1,0:T(8,128)}', space=vmem, size = 0x10000, scoped, tag = 'scratch operand']
  %s0 = inlined_call_operand.hbm [shape: f32[3], index: 0, kind: input, shape index: {}]
  %s1 = inlined_call_operand.hbm [shape: bf16[128,128], index: 1, kind: input, shape index: {}]
  %s2 = inlined_call_operand.hbm [shape: f32[128,128], index: 2, kind: input, shape index: {}]
  %s3 = inlined_call_operand.hbm [shape: bf16[3,128,128], index: 3, kind: input, shape index: {}]
  %s4 = inlined_call_operand.vmem [shape: f32[3,1,128], index: 4, kind: input, shape index: {}]
  %s5 = inlined_call_operand.vmem [shape: f32[8,128], index: 5, kind: input, shape index: {}]
  %s6 = inlined_call_operand.hbm [shape: f32[128,128], index: 6, kind: input, shape index: {}]
  %s7 = inlined_call_operand.vmem [shape: f32[1,128], index: 7, kind: input, shape index: {}]
  %s8 = inlined_call_operand.hbm [shape: f32[8,128], index: 8, kind: output, shape index: {}]
  %s9 = sld [smem:[#allocation0]]
  $region93: #{tpu_custom_call.1} parent=0
    _
  %s11 = ssub.s32 1, %s9
  %s12 = scalar_select 0, %s11, %s9
  $region1: #{tpu_custom_call.1} parent=0
    #allocation3 [shape = 'u8[512]{0}', space=smem, size = 0x200, scoped, tag = 'input window, operand 0, single buffered']
    #allocation4 [shape = 's32[2]{0}', space=sflag, size = 0x8, scoped, tag = 'scoped memory for tpu_custom_call.1']
    #allocation5 [shape = 's32[2]{0}', space=sflag, size = 0x8, scoped, tag = 'scoped memory for tpu_custom_call.1']
    #allocation6 [shape = 's32[2]{0}', space=sflag, size = 0x8, scoped, tag = 'scoped memory for tpu_custom_call.1']
    #allocation7 [shape = 'u8[32768]{0}', space=vmem, size = 0x8000, scoped, tag = 'input window, operand 1, single buffered']
    #allocation8 [shape = 'u8[65536]{0}', space=vmem, size = 0x10000, scoped, tag = 'input window, operand 2, single buffered']
    #allocation9 [shape = 's32[1]{0}', space=sflag, size = 0x4, scoped, tag = 'scoped memory for tpu_custom_call.1']
    #allocation10 [shape = 'u8[65536]{0}', space=vmem, size = 0x10000, scoped, tag = 'input window, operand 3']
    #allocation11 [shape = 'u8[65536]{0}', space=vmem, size = 0x10000, scoped, tag = 'input window, operand 6, single buffered']
    #allocation12 [shape = 'u8[4096]{0}', space=vmem, size = 0x1000, scoped, tag = 'output window, operand 0, single buffered']
    %13 = vsyncpa [#allocation6], 0
    %14 = vsyncpa [#allocation4], 0
    %15 = vsyncpa [#allocation9], 0
    %16 = vsyncpa [#allocation5], 0
    loop: start=0, step=1, limit=5
    $region2: #{tpu_custom_call.1} parent=1 // loop_pre_header
      _
    $region3: #{tpu_custom_call.1} parent=1 // loop_header
      %s18 = sphi 0, %s22
      %p19 = scmp.ge.s32.totalorder %s18, 5
      %s26 = sphi 0, %s26
      %s28 = sphi 0, %s26
      %s29 = sphi 0, %s28
      %s43 = sphi 0, %s29
      %s47 = sphi 0, %s47
      %s49 = sphi 0, %s47
      %s50 = sphi 0, %s49
      %s64 = sphi 0, %s50
      %s68 = sphi 0, %s68
      %s70 = sphi 0, %s68
      %s71 = sphi 0, %s70
      %s85 = sphi 0, %s71
      %s91 = sphi 0, %s93
      %s94 = sphi 0, %s91
      %s95 = sphi 0, %s94
      %s111 = sphi 0, %s95
      %s117 = sphi 0, %s119
      %s120 = sphi 0, %s117
      %s121 = sphi 0, %s120
      %s137 = sphi 0, %s121
      %s141 = sphi 0, %s141
      %s143 = sphi 0, %s141
      %s144 = sphi 0, %s143
      %s158 = sphi 0, %s144
      %s162 = sphi 0, %s162
      %s164 = sphi 0, %s162
      %s165 = sphi 0, %s164
      %s179 = sphi 0, %s165
      %s183 = sphi 0, %s183
      %s185 = sphi 0, %s183
      %s186 = sphi 0, %s185
      %s200 = sphi 0, %s186
      %s204 = sphi 0, %s204
      %s206 = sphi 0, %s204
      %s207 = sphi 0, %s206
      %s221 = sphi 0, %s207
    $region4: #{tpu_custom_call.1} parent=1 // loop_header_branch
      %21 = sbr.rel (%p19) target = $region8
    $region5: #{tpu_custom_call.1} parent=1 // loop_body
      %s23 = ssub.s32 %s18, 1
      %s24 = ssub.s32 %s18, 2
      %s25 = sadd.s32 %s18, 1
      %s27 = sadd.s32 %s26, 1
      %p30 = scmp.eq.s32.totalorder %s18, 2
      %p31 = scmp.ne.s32.totalorder %s26, %s28
      %p32 = scmp.eq.s32.totalorder %s18, 0
      %p33 = por %p31, %p32
      %p34 = scmp.ne.s32.totalorder %s26, %s28
      %p35 = scmp.eq.s32.totalorder %s23, 2
      %p36 = por %p34, %p35
      %p37 = scmp.ne.s32.totalorder %s28, %s29
      %p38 = scmp.eq.s32.totalorder %s23, 0
      %p39 = por %p37, %p38
      %p40 = scmp.ne.s32.totalorder %s28, %s29
      %p41 = scmp.eq.s32.totalorder %s24, 2
      %p42 = por %p40, %p41
      %p44 = scmp.ne.s32.totalorder %s29, %s43
      %p45 = scmp.eq.s32.totalorder %s24, 0
      %p46 = por %p44, %p45
      %s48 = sadd.s32 %s47, 1
      %p51 = scmp.eq.s32.totalorder %s18, 2
      %p52 = scmp.ne.s32.totalorder %s47, %s49
      %p53 = scmp.eq.s32.totalorder %s18, 0
      %p54 = por %p52, %p53
      %p55 = scmp.ne.s32.totalorder %s47, %s49
      %p56 = scmp.eq.s32.totalorder %s23, 2
      %p57 = por %p55, %p56
      %p58 = scmp.ne.s32.totalorder %s49, %s50
      %p59 = scmp.eq.s32.totalorder %s23, 0
      %p60 = por %p58, %p59
      %p61 = scmp.ne.s32.totalorder %s49, %s50
      %p62 = scmp.eq.s32.totalorder %s24, 2
      %p63 = por %p61, %p62
      %p65 = scmp.ne.s32.totalorder %s50, %s64
      %p66 = scmp.eq.s32.totalorder %s24, 0
      %p67 = por %p65, %p66
      %s69 = sadd.s32 %s68, 1
      %p72 = scmp.eq.s32.totalorder %s18, 2
      %p73 = scmp.ne.s32.totalorder %s68, %s70
      %p74 = scmp.eq.s32.totalorder %s18, 0
      %p75 = por %p73, %p74
      %p76 = scmp.ne.s32.totalorder %s68, %s70
      %p77 = scmp.eq.s32.totalorder %s23, 2
      %p78 = por %p76, %p77
      %p79 = scmp.ne.s32.totalorder %s70, %s71
      %p80 = scmp.eq.s32.totalorder %s23, 0
      %p81 = por %p79, %p80
      %p82 = scmp.ne.s32.totalorder %s70, %s71
      %p83 = scmp.eq.s32.totalorder %s24, 2
      %p84 = por %p82, %p83
      %p86 = scmp.ne.s32.totalorder %s71, %s85
      %p87 = scmp.eq.s32.totalorder %s24, 0
      %p88 = por %p86, %p87
      %s89 = ssub.s32 %s18, %s25
      %p90 = scmp.eq.s32.totalorder %s89, 0
      %s92 = sadd.s32 %s91, 1
      %s93 = scalar_select %p90, %s91, %s92
      %p96 = pneg %p90
      %p97 = scmp.eq.s32.totalorder %s18, 2
      %p98 = por %p96, %p97
      %p99 = scmp.ne.s32.totalorder %s91, %s94
      %p100 = scmp.eq.s32.totalorder %s18, 0
      %p101 = por %p99, %p100
      %p102 = scmp.ne.s32.totalorder %s91, %s94
      %p103 = scmp.eq.s32.totalorder %s23, 2
      %p104 = por %p102, %p103
      %p105 = scmp.ne.s32.totalorder %s94, %s95
      %p106 = scmp.eq.s32.totalorder %s23, 0
      %p107 = por %p105, %p106
      %p108 = scmp.ne.s32.totalorder %s94, %s95
      %p109 = scmp.eq.s32.totalorder %s24, 2
      %p110 = por %p108, %p109
      %p112 = scmp.ne.s32.totalorder %s95, %s111
      %p113 = scmp.eq.s32.totalorder %s24, 0
      %p114 = por %p112, %p113
      %s115 = ssub.s32 %s18, %s25
      %p116 = scmp.eq.s32.totalorder %s115, 0
      %s118 = sadd.s32 %s117, 1
      %s119 = scalar_select %p116, %s117, %s118
      %p122 = pneg %p116
      %p123 = scmp.eq.s32.totalorder %s18, 2
      %p124 = por %p122, %p123
      %p125 = scmp.ne.s32.totalorder %s117, %s120
      %p126 = scmp.eq.s32.totalorder %s18, 0
      %p127 = por %p125, %p126
      %p128 = scmp.ne.s32.totalorder %s117, %s120
      %p129 = scmp.eq.s32.totalorder %s23, 2
      %p130 = por %p128, %p129
      %p131 = scmp.ne.s32.totalorder %s120, %s121
      %p132 = scmp.eq.s32.totalorder %s23, 0
      %p133 = por %p131, %p132
      %p134 = scmp.ne.s32.totalorder %s120, %s121
      %p135 = scmp.eq.s32.totalorder %s24, 2
      %p136 = por %p134, %p135
      %p138 = scmp.ne.s32.totalorder %s121, %s137
      %p139 = scmp.eq.s32.totalorder %s24, 0
      %p140 = por %p138, %p139
      %s142 = sadd.s32 %s141, 1
      %p145 = scmp.eq.s32.totalorder %s18, 2
      %p146 = scmp.ne.s32.totalorder %s141, %s143
      %p147 = scmp.eq.s32.totalorder %s18, 0
      %p148 = por %p146, %p147
      %p149 = scmp.ne.s32.totalorder %s141, %s143
      %p150 = scmp.eq.s32.totalorder %s23, 2
      %p151 = por %p149, %p150
      %p152 = scmp.ne.s32.totalorder %s143, %s144
      %p153 = scmp.eq.s32.totalorder %s23, 0
      %p154 = por %p152, %p153
      %p155 = scmp.ne.s32.totalorder %s143, %s144
      %p156 = scmp.eq.s32.totalorder %s24, 2
      %p157 = por %p155, %p156
      %p159 = scmp.ne.s32.totalorder %s144, %s158
      %p160 = scmp.eq.s32.totalorder %s24, 0
      %p161 = por %p159, %p160
      %s163 = sadd.s32 %s162, 1
      %p166 = scmp.eq.s32.totalorder %s18, 2
      %p167 = scmp.ne.s32.totalorder %s162, %s164
      %p168 = scmp.eq.s32.totalorder %s18, 0
      %p169 = por %p167, %p168
      %p170 = scmp.ne.s32.totalorder %s162, %s164
      %p171 = scmp.eq.s32.totalorder %s23, 2
      %p172 = por %p170, %p171
      %p173 = scmp.ne.s32.totalorder %s164, %s165
      %p174 = scmp.eq.s32.totalorder %s23, 0
      %p175 = por %p173, %p174
      %p176 = scmp.ne.s32.totalorder %s164, %s165
      %p177 = scmp.eq.s32.totalorder %s24, 2
      %p178 = por %p176, %p177
      %p180 = scmp.ne.s32.totalorder %s165, %s179
      %p181 = scmp.eq.s32.totalorder %s24, 0
      %p182 = por %p180, %p181
      %s184 = sadd.s32 %s183, 1
      %p187 = scmp.eq.s32.totalorder %s18, 2
      %p188 = scmp.ne.s32.totalorder %s183, %s185
      %p189 = scmp.eq.s32.totalorder %s18, 0
      %p190 = por %p188, %p189
      %p191 = scmp.ne.s32.totalorder %s183, %s185
      %p192 = scmp.eq.s32.totalorder %s23, 2
      %p193 = por %p191, %p192
      %p194 = scmp.ne.s32.totalorder %s185, %s186
      %p195 = scmp.eq.s32.totalorder %s23, 0
      %p196 = por %p194, %p195
      %p197 = scmp.ne.s32.totalorder %s185, %s186
      %p198 = scmp.eq.s32.totalorder %s24, 2
      %p199 = por %p197, %p198
      %p201 = scmp.ne.s32.totalorder %s186, %s200
      %p202 = scmp.eq.s32.totalorder %s24, 0
      %p203 = por %p201, %p202
      %s205 = sadd.s32 %s204, 1
      %p208 = scmp.eq.s32.totalorder %s18, 2
      %p209 = scmp.ne.s32.totalorder %s204, %s206
      %p210 = scmp.eq.s32.totalorder %s18, 0
      %p211 = por %p209, %p210
      %p212 = scmp.ne.s32.totalorder %s204, %s206
      %p213 = scmp.eq.s32.totalorder %s23, 2
      %p214 = por %p212, %p213
      %p215 = scmp.ne.s32.totalorder %s206, %s207
      %p216 = scmp.eq.s32.totalorder %s23, 0
      %p217 = por %p215, %p216
      %p218 = scmp.ne.s32.totalorder %s206, %s207
      %p219 = scmp.eq.s32.totalorder %s24, 2
      %p220 = por %p218, %p219
      %p222 = scmp.ne.s32.totalorder %s207, %s221
      %p223 = scmp.eq.s32.totalorder %s24, 0
      %p224 = por %p222, %p223
      %p225 = scmp.le.s32.totalorder 1, %s18
      %p226 = scmp.lt.s32.totalorder %s18, 4
      %p227 = pnand %p225, %p226
      %p228 = pneg %p227
      // Predicated region
      $region9: #{tpu_custom_call.1} parent=5 // pred_check
        _
      $region10: #{tpu_custom_call.1} parent=5 // pred_check_branch
        %230 = sbr.rel (%p227) target = $region12
      $region11: #{tpu_custom_call.1} parent=5 // pred_region
        %s231 = ssub.s32 %s18, 1
        // Predicated region
        $region13: #{tpu_custom_call.1} parent=11 // pred_check
          %p232 = pneg %p39
        $region14: #{tpu_custom_call.1} parent=11 // pred_check_branch
          %234 = sbr.rel (%p232) target = $region16
        $region15: #{tpu_custom_call.1} parent=11 // pred_region
          %s236 = ssub.s32 16, 16
          %237 = vsyncadd [#allocation6], %s236
          %240 = dma.hbm_to_smem %s0, 16, [#allocation3], [#allocation6]
        $region16: #{tpu_custom_call.1} parent=11 // pred_fallthru
          _
        // Predicated region
        $region17: #{tpu_custom_call.1} parent=11 // pred_check
          %p241 = pneg %p60
        $region18: #{tpu_custom_call.1} parent=11 // pred_check_branch
          %243 = sbr.rel (%p241) target = $region20
        $region19: #{tpu_custom_call.1} parent=11 // pred_region
          %s245 = ssub.s32 1024, 1024
          %246 = vsyncadd [#allocation4], %s245
          %s247 = sshll.u32 [#allocation7], 4
          %s248 = int_to_ptr.vmem [resolvable:$true] %s247
          %253 = dma.hbm_to_vmem [thread:$0]  %s1, 1024, %s248, [#allocation4], 64, 64, 4
        $region20: #{tpu_custom_call.1} parent=11 // pred_fallthru
          _
        // Predicated region
        $region21: #{tpu_custom_call.1} parent=11 // pred_check
          %p254 = pneg %p81
        $region22: #{tpu_custom_call.1} parent=11 // pred_check_branch
          %256 = sbr.rel (%p254) target = $region24
        $region23: #{tpu_custom_call.1} parent=11 // pred_region
          %s258 = ssub.s32 2048, 2048
          %259 = vsyncadd [#allocation9], %s258
          %s260 = sshll.u32 [#allocation8], 4
          %s261 = int_to_ptr.vmem [resolvable:$true] %s260
          %266 = dma.hbm_to_vmem [thread:$0]  %s2, 2048, %s261, [#allocation9], 128, 128, 8
        $region24: #{tpu_custom_call.1} parent=11 // pred_fallthru
          _
        // Predicated region
        $region25: #{tpu_custom_call.1} parent=11 // pred_check
          %p267 = pneg %p154
        $region26: #{tpu_custom_call.1} parent=11 // pred_check_branch
          %269 = sbr.rel (%p267) target = $region28
        $region27: #{tpu_custom_call.1} parent=11 // pred_region
          _
        $region28: #{tpu_custom_call.1} parent=11 // pred_fallthru
          _
        // Predicated region
        $region29: #{tpu_custom_call.1} parent=11 // pred_check
          %p270 = pneg %p175
        $region30: #{tpu_custom_call.1} parent=11 // pred_check_branch
          %272 = sbr.rel (%p270) target = $region32
        $region31: #{tpu_custom_call.1} parent=11 // pred_region
          %s274 = ssub.s32 2048, 2048
          %275 = vsyncadd [#allocation9], %s274
          %s276 = sshll.u32 [#allocation11], 4
          %s277 = int_to_ptr.vmem [resolvable:$true] %s276
          %282 = dma.hbm_to_vmem [thread:$0]  %s6, 2048, %s277, [#allocation9], 128, 128, 8
        $region32: #{tpu_custom_call.1} parent=11 // pred_fallthru
          _
        // Predicated region
        $region33: #{tpu_custom_call.1} parent=11 // pred_check
          %p283 = pneg %p196
        $region34: #{tpu_custom_call.1} parent=11 // pred_check_branch
          %285 = sbr.rel (%p283) target = $region36
        $region35: #{tpu_custom_call.1} parent=11 // pred_region
          _
        $region36: #{tpu_custom_call.1} parent=11 // pred_fallthru
          _
      $region12: #{tpu_custom_call.1} parent=5 // pred_fallthru
        _
      %p286 = scmp.lt.s32.totalorder %s18, 3
      // Predicated region
      $region37: #{tpu_custom_call.1} parent=5 // pred_check
        %p287 = pneg %p286
      $region38: #{tpu_custom_call.1} parent=5 // pred_check_branch
        %289 = sbr.rel (%p287) target = $region40
      $region39: #{tpu_custom_call.1} parent=5 // pred_region
        // Predicated region
        $region41: #{tpu_custom_call.1} parent=39 // pred_check
          %p290 = pneg %p101
        $region42: #{tpu_custom_call.1} parent=39 // pred_check_branch
          %292 = sbr.rel (%p290) target = $region44
        $region43: #{tpu_custom_call.1} parent=39 // pred_region
          %s293 = sand.u32 %s18, 1
          %s294 = scalar_lea.sflag [#allocation4], %s293
          %s295 = sand.u32 %s91, 1
          %s296 = smul.addr %s295, 64
          %s297 = scalar_lea.vmem [#allocation10], %s296
          %s299 = ssub.s32 1024, 1024
          %300 = vsyncadd %s294, %s299
          %s301 = smul.addr %s18, 16
          %s302 = smul.addr %s301, 64
          %s303 = scalar_lea.hbm %s3, %s302
          %s304 = sshll.u32 %s297, 4
          %s305 = int_to_ptr.vmem [resolvable:$true] %s304
          %310 = dma.hbm_to_vmem [thread:$0]  %s303, 1024, %s305, %s294, 64, 64, 4
        $region44: #{tpu_custom_call.1} parent=39 // pred_fallthru
          _
        // Predicated region
        $region45: #{tpu_custom_call.1} parent=39 // pred_check
          %p311 = pneg %p127
        $region46: #{tpu_custom_call.1} parent=39 // pred_check_branch
          %313 = sbr.rel (%p311) target = $region48
        $region47: #{tpu_custom_call.1} parent=39 // pred_region
          %p314 = scmp.lt.s32.totalorder %s18, 2
          %s315 = scalar_select %p314, %s18, 2
          %s316 = scalar_lea.vmem %s4, %s315
        $region48: #{tpu_custom_call.1} parent=39 // pred_fallthru
          _
      $region40: #{tpu_custom_call.1} parent=5 // pred_fallthru
        _
      %p317 = scmp.le.s32.totalorder 1, %s18
      %p318 = scmp.lt.s32.totalorder %s18, 4
      %p319 = pnand %p317, %p318
      %p320 = pneg %p319
      // Predicated region
      $region49: #{tpu_custom_call.1} parent=5 // pred_check
        _
      $region50: #{tpu_custom_call.1} parent=5 // pred_check_branch
        %322 = sbr.rel (%p319) target = $region52
      $region51: #{tpu_custom_call.1} parent=5 // pred_region
        %s323 = ssub.s32 %s18, 1
        // Predicated region
        $region53: #{tpu_custom_call.1} parent=51 // pred_check
          %p324 = pneg %p39
        $region54: #{tpu_custom_call.1} parent=51 // pred_check_branch
          %326 = sbr.rel (%p324) target = $region56
        $region55: #{tpu_custom_call.1} parent=51 // pred_region
          %327 = dma.done [#allocation6], 16
        $region56: #{tpu_custom_call.1} parent=51 // pred_fallthru
          _
        // Predicated region
        $region57: #{tpu_custom_call.1} parent=51 // pred_check
          %p328 = pneg %p60
        $region58: #{tpu_custom_call.1} parent=51 // pred_check_branch
          %330 = sbr.rel (%p328) target = $region60
        $region59: #{tpu_custom_call.1} parent=51 // pred_region
          %331 = dma.done [#allocation4], 1024
        $region60: #{tpu_custom_call.1} parent=51 // pred_fallthru
          _
        // Predicated region
        $region61: #{tpu_custom_call.1} parent=51 // pred_check
          %p332 = pneg %p81
        $region62: #{tpu_custom_call.1} parent=51 // pred_check_branch
          %334 = sbr.rel (%p332) target = $region64
        $region63: #{tpu_custom_call.1} parent=51 // pred_region
          %335 = dma.done [#allocation9], 2048
        $region64: #{tpu_custom_call.1} parent=51 // pred_fallthru
          _
        %s336 = sand.u32 %s23, 1
        %s337 = scalar_lea.sflag [#allocation4], %s336
        %s338 = sand.u32 %s94, 1
        %s339 = smul.addr %s338, 64
        %s340 = scalar_lea.vmem [#allocation10], %s339
        // Predicated region
        $region65: #{tpu_custom_call.1} parent=51 // pred_check
          %p341 = pneg %p107
        $region66: #{tpu_custom_call.1} parent=51 // pred_check_branch
          %343 = sbr.rel (%p341) target = $region68
        $region67: #{tpu_custom_call.1} parent=51 // pred_region
          %344 = dma.done %s337, 1024
        $region68: #{tpu_custom_call.1} parent=51 // pred_fallthru
          _
        // Predicated region
        $region69: #{tpu_custom_call.1} parent=51 // pred_check
          %p345 = pneg %p175
        $region70: #{tpu_custom_call.1} parent=51 // pred_check_branch
          %347 = sbr.rel (%p345) target = $region72
        $region71: #{tpu_custom_call.1} parent=51 // pred_region
          %348 = dma.done [#allocation9], 2048
        $region72: #{tpu_custom_call.1} parent=51 // pred_fallthru
          _
        %349 = sfence
        %p350 = pneg %p39
        %p351 = pneg %p36
        %p352 = pneg %p60
        %p353 = pneg %p57
        %p354 = pneg %p81
        %p355 = pneg %p78
        %s356 = sand.u32 %s23, 1
        %s357 = scalar_lea.sflag [#allocation4], %s356
        %s358 = sand.u32 %s94, 1
        %s359 = smul.addr %s358, 64
        %s360 = scalar_lea.vmem [#allocation10], %s359
        %p361 = pneg %p107
        %p362 = pneg %p104
        %p363 = scmp.lt.s32.totalorder %s23, 2
        %s364 = scalar_select %p363, %s23, 2
        %s365 = scalar_lea.vmem %s4, %s364
        %p366 = pneg %p133
        %p367 = pneg %p130
        %p368 = pneg %p154
        %p369 = pneg %p151
        %p370 = pneg %p175
        %p371 = pneg %p172
        %p372 = pneg %p196
        %p373 = pneg %p193
        %p374 = pneg %p217
        %p375 = pneg %p214
        %p376 = scmp.lt.s32.totalorder %s23, 2
        %s377 = scalar_select %p376, %s23, 2
        %s378 = scalar_lea.vmem %s4, %s377
        %p380 = scmp.eq.s32.totalorder %s23, 0
        // Predicated region
        $region73: #{tpu_custom_call.1} parent=51 // pred_check
          %p381 = pneg %p380
        $region74: #{tpu_custom_call.1} parent=51 // pred_check_branch
          %383 = sbr.rel (%p381) target = $region76
        $region75: #{tpu_custom_call.1} parent=51 // pred_region
          %v384 = vld [vmem:[#allocation8] sm:$0xff]
          %v385 = vld [vmem:[#allocation8 + $0x8] sm:$0xff]
          %v386 = vld [vmem:[#allocation8 + $0x10] sm:$0xff]
          %v387 = vld [vmem:[#allocation8 + $0x18] sm:$0xff]
          %v388 = vld [vmem:[#allocation8 + $0x20] sm:$0xff]
          %v389 = vld [vmem:[#allocation8 + $0x28] sm:$0xff]
          %v390 = vld [vmem:[#allocation8 + $0x30] sm:$0xff]
          %v391 = vld [vmem:[#allocation8 + $0x38] sm:$0xff]
          %v392 = vld [vmem:[#allocation8 + $0x40] sm:$0xff]
          %v393 = vld [vmem:[#allocation8 + $0x48] sm:$0xff]
          %v394 = vld [vmem:[#allocation8 + $0x50] sm:$0xff]
          %v395 = vld [vmem:[#allocation8 + $0x58] sm:$0xff]
          %v396 = vld [vmem:[#allocation8 + $0x60] sm:$0xff]
          %v397 = vld [vmem:[#allocation8 + $0x68] sm:$0xff]
          %v398 = vld [vmem:[#allocation8 + $0x70] sm:$0xff]
          %v399 = vld [vmem:[#allocation8 + $0x78] sm:$0xff]
          %400 = vst [vmem:[#allocation2] sm:$0xff] %v384
          %401 = vst [vmem:[#allocation2 + $0x8] sm:$0xff] %v385
          %402 = vst [vmem:[#allocation2 + $0x10] sm:$0xff] %v386
          %403 = vst [vmem:[#allocation2 + $0x18] sm:$0xff] %v387
          %404 = vst [vmem:[#allocation2 + $0x20] sm:$0xff] %v388
          %405 = vst [vmem:[#allocation2 + $0x28] sm:$0xff] %v389
          %406 = vst [vmem:[#allocation2 + $0x30] sm:$0xff] %v390
          %407 = vst [vmem:[#allocation2 + $0x38] sm:$0xff] %v391
          %408 = vst [vmem:[#allocation2 + $0x40] sm:$0xff] %v392
          %409 = vst [vmem:[#allocation2 + $0x48] sm:$0xff] %v393
          %410 = vst [vmem:[#allocation2 + $0x50] sm:$0xff] %v394
          %411 = vst [vmem:[#allocation2 + $0x58] sm:$0xff] %v395
          %412 = vst [vmem:[#allocation2 + $0x60] sm:$0xff] %v396
          %413 = vst [vmem:[#allocation2 + $0x68] sm:$0xff] %v397
          %414 = vst [vmem:[#allocation2 + $0x70] sm:$0xff] %v398
          %415 = vst [vmem:[#allocation2 + $0x78] sm:$0xff] %v399
        $region76: #{tpu_custom_call.1} parent=51 // pred_fallthru
          _
        %v416 = vld [vmem:[#allocation2] sm:$0xff]
        %v417 = vld [vmem:[#allocation2 + $0x8] sm:$0xff]
        %v418 = vld [vmem:[#allocation2 + $0x10] sm:$0xff]
        %v419 = vld [vmem:[#allocation2 + $0x18] sm:$0xff]
        %v420 = vld [vmem:[#allocation2 + $0x20] sm:$0xff]
        %v421 = vld [vmem:[#allocation2 + $0x28] sm:$0xff]
        %v422 = vld [vmem:[#allocation2 + $0x30] sm:$0xff]
        %v423 = vld [vmem:[#allocation2 + $0x38] sm:$0xff]
        %v424 = vld [vmem:[#allocation2 + $0x40] sm:$0xff]
        %v425 = vld [vmem:[#allocation2 + $0x48] sm:$0xff]
        %v426 = vld [vmem:[#allocation2 + $0x50] sm:$0xff]
        %v427 = vld [vmem:[#allocation2 + $0x58] sm:$0xff]
        %v428 = vld [vmem:[#allocation2 + $0x60] sm:$0xff]
        %v429 = vld [vmem:[#allocation2 + $0x68] sm:$0xff]
        %v430 = vld [vmem:[#allocation2 + $0x70] sm:$0xff]
        %v431 = vld [vmem:[#allocation2 + $0x78] sm:$0xff]
        %v432 = vpack.c.bf16 %v417, %v416
        %v433 = vpack.c.bf16 %v419, %v418
        %v434 = vpack.c.bf16 %v421, %v420
        %v435 = vpack.c.bf16 %v423, %v422
        %v436 = vpack.c.bf16 %v425, %v424
        %v437 = vpack.c.bf16 %v427, %v426
        %v438 = vpack.c.bf16 %v429, %v428
        %v439 = vpack.c.bf16 %v431, %v430
        %v440 = vld [vmem:[%s340] sm:$0xf]
        %v441 = vld [vmem:[%s340 + $0x4] sm:$0xf]
        %v442 = vld [vmem:[%s340 + $0x8] sm:$0xf]
        %v443 = vld [vmem:[%s340 + $0xc] sm:$0xf]
        %v444 = vld [vmem:[%s340 + $0x10] sm:$0xf]
        %v445 = vld [vmem:[%s340 + $0x14] sm:$0xf]
        %v446 = vld [vmem:[%s340 + $0x18] sm:$0xf]
        %v447 = vld [vmem:[%s340 + $0x1c] sm:$0xf]
        %v448 = vld [vmem:[%s340 + $0x20] sm:$0xf]
        %v449 = vld [vmem:[%s340 + $0x24] sm:$0xf]
        %v450 = vld [vmem:[%s340 + $0x28] sm:$0xf]
        %v451 = vld [vmem:[%s340 + $0x2c] sm:$0xf]
        %v452 = vld [vmem:[%s340 + $0x30] sm:$0xf]
        %v453 = vld [vmem:[%s340 + $0x34] sm:$0xf]
        %v454 = vld [vmem:[%s340 + $0x38] sm:$0xf]
        %v455 = vld [vmem:[%s340 + $0x3c] sm:$0xf]
        %v472 = vunpack.c.l.b16 %v440
        %v473 = vunpack.c.l.b16 %v441
        %v474 = vunpack.c.l.b16 %v442
        %v475 = vunpack.c.l.b16 %v443
        %v476 = vunpack.c.l.b16 %v444
        %v477 = vunpack.c.l.b16 %v445
        %v478 = vunpack.c.l.b16 %v446
        %v479 = vunpack.c.l.b16 %v447
        %v480 = vunpack.c.l.b16 %v448
        %v481 = vunpack.c.l.b16 %v449
        %v482 = vunpack.c.l.b16 %v450
        %v483 = vunpack.c.l.b16 %v451
        %v484 = vunpack.c.l.b16 %v452
        %v485 = vunpack.c.l.b16 %v453
        %v486 = vunpack.c.l.b16 %v454
        %v487 = vunpack.c.l.b16 %v455
        %v488 = vpack.c.b16 %v473, %v472
        %v489 = vpack.c.b16 %v475, %v474
        %v490 = vpack.c.b16 %v477, %v476
        %v491 = vpack.c.b16 %v479, %v478
        %v492 = vpack.c.b16 %v481, %v480
        %v493 = vpack.c.b16 %v483, %v482
        %v494 = vpack.c.b16 %v485, %v484
        %v495 = vpack.c.b16 %v487, %v486
        %504 = vmatprep.subr.bf16.mxu0 0
        %505 = vmatpush1.bf16.msra.mxu0 %v488
        %506 = vmatprep.subr.bf16.mxu0 0
        %507 = vmatpush1.bf16.msra.mxu0 %v489
        %508 = vmatprep.subr.bf16.mxu0 0
        %509 = vmatpush1.bf16.msra.mxu0 %v490
        %510 = vmatprep.subr.bf16.mxu0 0
        %511 = vmatpush1.bf16.msra.mxu0 %v491
        %512 = vmatprep.subr.bf16.mxu0 0
        %513 = vmatpush1.bf16.msra.mxu0 %v492
        %514 = vmatprep.subr.bf16.mxu0 0
        %515 = vmatpush1.bf16.msra.mxu0 %v493
        %516 = vmatprep.subr.bf16.mxu0 0
        %517 = vmatpush1.bf16.msra.mxu0 %v494
        %518 = vmatprep.subr.bf16.mxu0 0
        %519 = vmatpush1.bf16.msra.mxu0 %v495
        %520 = vmatprep.subr.bf16.mxu0 0
        %521 = vmatpush1.bf16.msra.mxu0 0
        %522 = vmatprep.subr.bf16.mxu0 0
        %523 = vmatpush1.bf16.msra.mxu0 0
        %524 = vmatprep.subr.bf16.mxu0 0
        %525 = vmatpush1.bf16.msra.mxu0 0
        %526 = vmatprep.subr.bf16.mxu0 0
        %527 = vmatpush1.bf16.msra.mxu0 0
        %528 = vmatprep.subr.bf16.mxu0 0
        %529 = vmatpush1.bf16.msra.mxu0 0
        %530 = vmatprep.subr.bf16.mxu0 0
        %531 = vmatpush1.bf16.msra.mxu0 0
        %532 = vmatprep.subr.bf16.mxu0 0
        %533 = vmatpush1.bf16.msra.mxu0 0
        %534 = vmatprep.subr.bf16.mxu0 0
        %535 = vmatpush1.bf16.msra.mxu0 0
        %536 = vmatprep.mubr.bf16.mxu0 0
        %537 = vmatmul.mubr.bf16.gmra.mrb[0].mxu0 %v432
        %v538 = vpop.f32.mrb[0].mxu0
        %v539 = vadd.f32 0.0, %v538
        %v540 = vpop.f32.mrb[0].mxu0
        %v541 = vpop.f32.mrb[0].mxu0
        %v542 = vadd.f32 0.0, %v541
        %v543 = vpop.f32.mrb[0].mxu0
        %544 = vmatprep.mubr.bf16.mxu0 0
        %545 = vmatmul.mubr.bf16.gmra.mrb[0].mxu0 %v433
        %v546 = vpop.f32.mrb[0].mxu0
        %v547 = vadd.f32 0.0, %v546
        %v548 = vpop.f32.mrb[0].mxu0
        %v549 = vpop.f32.mrb[0].mxu0
        %v550 = vadd.f32 0.0, %v549
        %v551 = vpop.f32.mrb[0].mxu0
        %552 = vmatprep.mubr.bf16.mxu0 0
        %553 = vmatmul.mubr.bf16.gmra.mrb[0].mxu0 %v434
        %v554 = vpop.f32.mrb[0].mxu0
        %v555 = vadd.f32 0.0, %v554
        %v556 = vpop.f32.mrb[0].mxu0
        %v557 = vpop.f32.mrb[0].mxu0
        %v558 = vadd.f32 0.0, %v557
        %v559 = vpop.f32.mrb[0].mxu0
        %560 = vmatprep.mubr.bf16.mxu0 0
        %561 = vmatmul.mubr.bf16.gmra.mrb[0].mxu0 %v435
        %v562 = vpop.f32.mrb[0].mxu0
        %v563 = vadd.f32 0.0, %v562
        %v564 = vpop.f32.mrb[0].mxu0
        %v565 = vpop.f32.mrb[0].mxu0
        %v566 = vadd.f32 0.0, %v565
        %v567 = vpop.f32.mrb[0].mxu0
        %568 = vmatprep.mubr.bf16.mxu0 0
        %569 = vmatmul.mubr.bf16.gmra.mrb[0].mxu0 %v436
        %v570 = vpop.f32.mrb[0].mxu0
        %v571 = vadd.f32 0.0, %v570
        %v572 = vpop.f32.mrb[0].mxu0
        %v573 = vpop.f32.mrb[0].mxu0
        %v574 = vadd.f32 0.0, %v573
        %v575 = vpop.f32.mrb[0].mxu0
        %576 = vmatprep.mubr.bf16.mxu0 0
        %577 = vmatmul.mubr.bf16.gmra.mrb[0].mxu0 %v437
        %v578 = vpop.f32.mrb[0].mxu0
        %v579 = vadd.f32 0.0, %v578
        %v580 = vpop.f32.mrb[0].mxu0
        %v581 = vpop.f32.mrb[0].mxu0
        %v582 = vadd.f32 0.0, %v581
        %v583 = vpop.f32.mrb[0].mxu0
        %584 = vmatprep.mubr.bf16.mxu0 0
        %585 = vmatmul.mubr.bf16.gmra.mrb[0].mxu0 %v438
        %v586 = vpop.f32.mrb[0].mxu0
        %v587 = vadd.f32 0.0, %v586
        %v588 = vpop.f32.mrb[0].mxu0
        %v589 = vpop.f32.mrb[0].mxu0
        %v590 = vadd.f32 0.0, %v589
        %v591 = vpop.f32.mrb[0].mxu0
        %592 = vmatprep.mubr.bf16.mxu0 0
        %593 = vmatmul.mubr.bf16.gmra.mrb[0].mxu0 %v439
        %v594 = vpop.f32.mrb[0].mxu0
        %v595 = vadd.f32 0.0, %v594
        %v596 = vpop.f32.mrb[0].mxu0
        %v597 = vpop.f32.mrb[0].mxu0
        %v598 = vadd.f32 0.0, %v597
        %v599 = vpop.f32.mrb[0].mxu0
        %600 = vdwg.mxu0
        %v601 = vld [vmem:[#allocation7] sm:$0xf]
        %v602 = vld [vmem:[#allocation7 + $0x4] sm:$0xf]
        %v603 = vld [vmem:[#allocation7 + $0x8] sm:$0xf]
        %v604 = vld [vmem:[#allocation7 + $0xc] sm:$0xf]
        %v605 = vld [vmem:[#allocation7 + $0x10] sm:$0xf]
        %v606 = vld [vmem:[#allocation7 + $0x14] sm:$0xf]
        %v607 = vld [vmem:[#allocation7 + $0x18] sm:$0xf]
        %v608 = vld [vmem:[#allocation7 + $0x1c] sm:$0xf]
        %v609 = vld [vmem:[#allocation7 + $0x20] sm:$0xf]
        %v610 = vld [vmem:[#allocation7 + $0x24] sm:$0xf]
        %v611 = vld [vmem:[#allocation7 + $0x28] sm:$0xf]
        %v612 = vld [vmem:[#allocation7 + $0x2c] sm:$0xf]
        %v613 = vld [vmem:[#allocation7 + $0x30] sm:$0xf]
        %v614 = vld [vmem:[#allocation7 + $0x34] sm:$0xf]
        %v615 = vld [vmem:[#allocation7 + $0x38] sm:$0xf]
        %v616 = vld [vmem:[#allocation7 + $0x3c] sm:$0xf]
        %v617 = vpack.c.bf16 %v542, %v539
        %v618 = vpack.c.bf16 %v550, %v547
        %v619 = vpack.c.bf16 %v558, %v555
        %v620 = vpack.c.bf16 %v566, %v563
        %v621 = vpack.c.bf16 %v574, %v571
        %v622 = vpack.c.bf16 %v582, %v579
        %v623 = vpack.c.bf16 %v590, %v587
        %v624 = vpack.c.bf16 %v598, %v595
        %v625 = vld [vmem:[%s378] sm:$0x1]
        %v627 = vlaneseq
        %v628 = vshrl.u32 %v627, 7
        %v629 = vsub.s32 0, %v628
        %v630 = vrot.slane %v625, %v629
        %v648 = vunpack.c.l.b16 %v601
        %v649 = vunpack.c.l.b16 %v602
        %v650 = vunpack.c.l.b16 %v603
        %v651 = vunpack.c.l.b16 %v604
        %v652 = vunpack.c.l.b16 %v605
        %v653 = vunpack.c.l.b16 %v606
        %v654 = vunpack.c.l.b16 %v607
        %v655 = vunpack.c.l.b16 %v608
        %v656 = vunpack.c.l.b16 %v609
        %v657 = vunpack.c.l.b16 %v610
        %v658 = vunpack.c.l.b16 %v611
        %v659 = vunpack.c.l.b16 %v612
        %v660 = vunpack.c.l.b16 %v613
        %v661 = vunpack.c.l.b16 %v614
        %v662 = vunpack.c.l.b16 %v615
        %v663 = vunpack.c.l.b16 %v616
        %v664 = vpack.c.b16 %v649, %v648
        %v665 = vpack.c.b16 %v651, %v650
        %v666 = vpack.c.b16 %v653, %v652
        %v667 = vpack.c.b16 %v655, %v654
        %v668 = vpack.c.b16 %v657, %v656
        %v669 = vpack.c.b16 %v659, %v658
        %v670 = vpack.c.b16 %v661, %v660
        %v671 = vpack.c.b16 %v663, %v662
        %680 = vmatprep.subr.bf16.mxu0 0
        %681 = vmatpush1.bf16.msra.mxu0 %v617
        %682 = vmatprep.subr.bf16.mxu0 0
        %683 = vmatpush1.bf16.msra.mxu0 %v618
        %684 = vmatprep.subr.bf16.mxu0 0
        %685 = vmatpush1.bf16.msra.mxu0 %v619
        %686 = vmatprep.subr.bf16.mxu0 0
        %687 = vmatpush1.bf16.msra.mxu0 %v620
        %688 = vmatprep.subr.bf16.mxu0 0
        %689 = vmatpush1.bf16.msra.mxu0 %v621
        %690 = vmatprep.subr.bf16.mxu0 0
        %691 = vmatpush1.bf16.msra.mxu0 %v622
        %692 = vmatprep.subr.bf16.mxu0 0
        %693 = vmatpush1.bf16.msra.mxu0 %v623
        %694 = vmatprep.subr.bf16.mxu0 0
        %695 = vmatpush1.bf16.msra.mxu0 %v624
        %696 = vmatprep.subr.bf16.mxu0 0
        %697 = vmatpush1.bf16.msra.mxu0 0
        %698 = vmatprep.subr.bf16.mxu0 0
        %699 = vmatpush1.bf16.msra.mxu0 0
        %700 = vmatprep.subr.bf16.mxu0 0
        %701 = vmatpush1.bf16.msra.mxu0 0
        %702 = vmatprep.subr.bf16.mxu0 0
        %703 = vmatpush1.bf16.msra.mxu0 0
        %704 = vmatprep.subr.bf16.mxu0 0
        %705 = vmatpush1.bf16.msra.mxu0 0
        %706 = vmatprep.subr.bf16.mxu0 0
        %707 = vmatpush1.bf16.msra.mxu0 0
        %708 = vmatprep.subr.bf16.mxu0 0
        %709 = vmatpush1.bf16.msra.mxu0 0
        %710 = vmatprep.subr.bf16.mxu0 0
        %711 = vmatpush1.bf16.msra.mxu0 0
        %712 = vmatprep.mubr.bf16.mxu0 0
        %713 = vmatmul.mubr.bf16.gmra.mrb[0].mxu0 %v664
        %v714 = vpop.f32.mrb[0].mxu0
        %v715 = vadd.f32 %v630, %v714
        %v716 = vpop.f32.mrb[0].mxu0
        %v717 = vpop.f32.mrb[0].mxu0
        %v718 = vadd.f32 %v630, %v717
        %v719 = vpop.f32.mrb[0].mxu0
        %720 = vmatprep.mubr.bf16.mxu0 0
        %721 = vmatmul.mubr.bf16.gmra.mrb[0].mxu0 %v665
        %v722 = vpop.f32.mrb[0].mxu0
        %v723 = vadd.f32 %v630, %v722
        %v724 = vpop.f32.mrb[0].mxu0
        %v725 = vpop.f32.mrb[0].mxu0
        %v726 = vadd.f32 %v630, %v725
        %v727 = vpop.f32.mrb[0].mxu0
        %728 = vmatprep.mubr.bf16.mxu0 0
        %729 = vmatmul.mubr.bf16.gmra.mrb[0].mxu0 %v666
        %v730 = vpop.f32.mrb[0].mxu0
        %v731 = vadd.f32 %v630, %v730
        %v732 = vpop.f32.mrb[0].mxu0
        %v733 = vpop.f32.mrb[0].mxu0
        %v734 = vadd.f32 %v630, %v733
        %v735 = vpop.f32.mrb[0].mxu0
        %736 = vmatprep.mubr.bf16.mxu0 0
        %737 = vmatmul.mubr.bf16.gmra.mrb[0].mxu0 %v667
        %v738 = vpop.f32.mrb[0].mxu0
        %v739 = vadd.f32 %v630, %v738
        %v740 = vpop.f32.mrb[0].mxu0
        %v741 = vpop.f32.mrb[0].mxu0
        %v742 = vadd.f32 %v630, %v741
        %v743 = vpop.f32.mrb[0].mxu0
        %744 = vmatprep.mubr.bf16.mxu0 0
        %745 = vmatmul.mubr.bf16.gmra.mrb[0].mxu0 %v668
        %v746 = vpop.f32.mrb[0].mxu0
        %v747 = vadd.f32 %v630, %v746
        %v748 = vpop.f32.mrb[0].mxu0
        %v749 = vpop.f32.mrb[0].mxu0
        %v750 = vadd.f32 %v630, %v749
        %v751 = vpop.f32.mrb[0].mxu0
        %752 = vmatprep.mubr.bf16.mxu0 0
        %753 = vmatmul.mubr.bf16.gmra.mrb[0].mxu0 %v669
        %v754 = vpop.f32.mrb[0].mxu0
        %v755 = vadd.f32 %v630, %v754
        %v756 = vpop.f32.mrb[0].mxu0
        %v757 = vpop.f32.mrb[0].mxu0
        %v758 = vadd.f32 %v630, %v757
        %v759 = vpop.f32.mrb[0].mxu0
        %760 = vmatprep.mubr.bf16.mxu0 0
        %761 = vmatmul.mubr.bf16.gmra.mrb[0].mxu0 %v670
        %v762 = vpop.f32.mrb[0].mxu0
        %v763 = vadd.f32 %v630, %v762
        %v764 = vpop.f32.mrb[0].mxu0
        %v765 = vpop.f32.mrb[0].mxu0
        %v766 = vadd.f32 %v630, %v765
        %v767 = vpop.f32.mrb[0].mxu0
        %768 = vmatprep.mubr.bf16.mxu0 0
        %769 = vmatmul.mubr.bf16.gmra.mrb[0].mxu0 %v671
        %v770 = vpop.f32.mrb[0].mxu0
        %v771 = vadd.f32 %v630, %v770
        %v772 = vpop.f32.mrb[0].mxu0
        %v773 = vpop.f32.mrb[0].mxu0
        %v774 = vadd.f32 %v630, %v773
        %v775 = vpop.f32.mrb[0].mxu0
        %776 = vdwg.mxu0
        %s777 = sld [smem:[#allocation3 + %s23]]
        %vm778 = vcmp.ge.f32.partialorder %v715, 0.0
        %vm779 = vcmp.ge.f32.partialorder %v718, 0.0
        %vm780 = vcmp.ge.f32.partialorder %v723, 0.0
        %vm781 = vcmp.ge.f32.partialorder %v726, 0.0
        %vm782 = vcmp.ge.f32.partialorder %v731, 0.0
        %vm783 = vcmp.ge.f32.partialorder %v734, 0.0
        %vm784 = vcmp.ge.f32.partialorder %v739, 0.0
        %vm785 = vcmp.ge.f32.partialorder %v742, 0.0
        %vm786 = vcmp.ge.f32.partialorder %v747, 0.0
        %vm787 = vcmp.ge.f32.partialorder %v750, 0.0
        %vm788 = vcmp.ge.f32.partialorder %v755, 0.0
        %vm789 = vcmp.ge.f32.partialorder %v758, 0.0
        %vm790 = vcmp.ge.f32.partialorder %v763, 0.0
        %vm791 = vcmp.ge.f32.partialorder %v766, 0.0
        %vm792 = vcmp.ge.f32.partialorder %v771, 0.0
        %vm793 = vcmp.ge.f32.partialorder %v774, 0.0
        %v794 = vstv %s777
        %v795 = vmul.f32 %v794, %v715
        %v796 = vmul.f32 %v794, %v718
        %v797 = vmul.f32 %v794, %v723
        %v798 = vmul.f32 %v794, %v726
        %v799 = vmul.f32 %v794, %v731
        %v800 = vmul.f32 %v794, %v734
        %v801 = vmul.f32 %v794, %v739
        %v802 = vmul.f32 %v794, %v742
        %v803 = vmul.f32 %v794, %v747
        %v804 = vmul.f32 %v794, %v750
        %v805 = vmul.f32 %v794, %v755
        %v806 = vmul.f32 %v794, %v758
        %v807 = vmul.f32 %v794, %v763
        %v808 = vmul.f32 %v794, %v766
        %v809 = vmul.f32 %v794, %v771
        %v810 = vmul.f32 %v794, %v774
        %v811 = vsel %vm778, %v715, %v795
        %v812 = vsel %vm779, %v718, %v796
        %v813 = vsel %vm780, %v723, %v797
        %v814 = vsel %vm781, %v726, %v798
        %v815 = vsel %vm782, %v731, %v799
        %v816 = vsel %vm783, %v734, %v800
        %v817 = vsel %vm784, %v739, %v801
        %v818 = vsel %vm785, %v742, %v802
        %v819 = vsel %vm786, %v747, %v803
        %v820 = vsel %vm787, %v750, %v804
        %v821 = vsel %vm788, %v755, %v805
        %v822 = vsel %vm789, %v758, %v806
        %v823 = vsel %vm790, %v763, %v807
        %v824 = vsel %vm791, %v766, %v808
        %v825 = vsel %vm792, %v771, %v809
        %v826 = vsel %vm793, %v774, %v810
        %827 = vst [vmem:[#allocation2] sm:$0xff] %v811
        %828 = vst [vmem:[#allocation2 + $0x8] sm:$0xff] %v812
        %829 = vst [vmem:[#allocation2 + $0x10] sm:$0xff] %v813
        %830 = vst [vmem:[#allocation2 + $0x18] sm:$0xff] %v814
        %831 = vst [vmem:[#allocation2 + $0x20] sm:$0xff] %v815
        %832 = vst [vmem:[#allocation2 + $0x28] sm:$0xff] %v816
        %833 = vst [vmem:[#allocation2 + $0x30] sm:$0xff] %v817
        %834 = vst [vmem:[#allocation2 + $0x38] sm:$0xff] %v818
        %835 = vst [vmem:[#allocation2 + $0x40] sm:$0xff] %v819
        %836 = vst [vmem:[#allocation2 + $0x48] sm:$0xff] %v820
        %837 = vst [vmem:[#allocation2 + $0x50] sm:$0xff] %v821
        %838 = vst [vmem:[#allocation2 + $0x58] sm:$0xff] %v822
        %839 = vst [vmem:[#allocation2 + $0x60] sm:$0xff] %v823
        %840 = vst [vmem:[#allocation2 + $0x68] sm:$0xff] %v824
        %841 = vst [vmem:[#allocation2 + $0x70] sm:$0xff] %v825
        %842 = vst [vmem:[#allocation2 + $0x78] sm:$0xff] %v826
        %p843 = scmp.eq.s32.totalorder %s23, 2
        // Predicated region
        $region77: #{tpu_custom_call.1} parent=51 // pred_check
          %p844 = pneg %p843
        $region78: #{tpu_custom_call.1} parent=51 // pred_check_branch
          %846 = sbr.rel (%p844) target = $region80
        $region79: #{tpu_custom_call.1} parent=51 // pred_region
          %v847 = vld [vmem:[%s5] sm:$0xff]
          %v848 = vld [vmem:[#allocation2] sm:$0xff]
          %v849 = vld [vmem:[#allocation2 + $0x8] sm:$0xff]
          %v850 = vld [vmem:[#allocation2 + $0x10] sm:$0xff]
          %v851 = vld [vmem:[#allocation2 + $0x18] sm:$0xff]
          %v852 = vld [vmem:[#allocation2 + $0x20] sm:$0xff]
          %v853 = vld [vmem:[#allocation2 + $0x28] sm:$0xff]
          %v854 = vld [vmem:[#allocation2 + $0x30] sm:$0xff]
          %v855 = vld [vmem:[#allocation2 + $0x38] sm:$0xff]
          %v856 = vld [vmem:[#allocation2 + $0x40] sm:$0xff]
          %v857 = vld [vmem:[#allocation2 + $0x48] sm:$0xff]
          %v858 = vld [vmem:[#allocation2 + $0x50] sm:$0xff]
          %v859 = vld [vmem:[#allocation2 + $0x58] sm:$0xff]
          %v860 = vld [vmem:[#allocation2 + $0x60] sm:$0xff]
          %v861 = vld [vmem:[#allocation2 + $0x68] sm:$0xff]
          %v862 = vld [vmem:[#allocation2 + $0x70] sm:$0xff]
          %v863 = vld [vmem:[#allocation2 + $0x78] sm:$0xff]
          %864 = vmatprep.subr.mxu0 0.0
          %865 = vmatpush1.msra.mxu0 %v848
          %866 = vmatprep.subr.mxu0 0.0
          %867 = vmatpush1.msra.mxu0 %v849
          %868 = vmatprep.subr.mxu0 0.0
          %869 = vmatpush1.msra.mxu0 %v850
          %870 = vmatprep.subr.mxu0 0.0
          %871 = vmatpush1.msra.mxu0 %v851
          %872 = vmatprep.subr.mxu0 0.0
          %873 = vmatpush1.msra.mxu0 %v852
          %874 = vmatprep.subr.mxu0 0.0
          %875 = vmatpush1.msra.mxu0 %v853
          %876 = vmatprep.subr.mxu0 0.0
          %877 = vmatpush1.msra.mxu0 %v854
          %878 = vmatprep.subr.mxu0 0.0
          %879 = vmatpush1.msra.mxu0 %v855
          %880 = vmatprep.subr.mxu0 0.0
          %881 = vmatpush1.msra.mxu0 %v856
          %882 = vmatprep.subr.mxu0 0.0
          %883 = vmatpush1.msra.mxu0 %v857
          %884 = vmatprep.subr.mxu0 0.0
          %885 = vmatpush1.msra.mxu0 %v858
          %886 = vmatprep.subr.mxu0 0.0
          %887 = vmatpush1.msra.mxu0 %v859
          %888 = vmatprep.subr.mxu0 0.0
          %889 = vmatpush1.msra.mxu0 %v860
          %890 = vmatprep.subr.mxu0 0.0
          %891 = vmatpush1.msra.mxu0 %v861
          %892 = vmatprep.subr.mxu0 0.0
          %893 = vmatpush1.msra.mxu0 %v862
          %894 = vmatprep.subr.mxu0 0.0
          %895 = vmatpush1.msra.mxu0 %v863
          %896 = vmatprep.subr.mxu0 0.0
          %897 = vmatpush1.msra.mxu0 0.0
          %898 = vmatprep.subr.mxu0 0.0
          %899 = vmatpush1.msra.mxu0 0.0
          %900 = vmatprep.subr.mxu0 0.0
          %901 = vmatpush1.msra.mxu0 0.0
          %902 = vmatprep.subr.mxu0 0.0
          %903 = vmatpush1.msra.mxu0 0.0
          %904 = vmatprep.subr.mxu0 0.0
          %905 = vmatpush1.msra.mxu0 0.0
          %906 = vmatprep.subr.mxu0 0.0
          %907 = vmatpush1.msra.mxu0 0.0
          %908 = vmatprep.subr.mxu0 0.0
          %909 = vmatpush1.msra.mxu0 0.0
          %910 = vmatprep.subr.mxu0 0.0
          %911 = vmatpush1.msra.mxu0 0.0
          %912 = vmatprep.subr.mxu0 0.0
          %913 = vmatpush1.msra.mxu0 0.0
          %914 = vmatprep.subr.mxu0 0.0
          %915 = vmatpush1.msra.mxu0 0.0
          %916 = vmatprep.subr.mxu0 0.0
          %917 = vmatpush1.msra.mxu0 0.0
          %918 = vmatprep.subr.mxu0 0.0
          %919 = vmatpush1.msra.mxu0 0.0
          %920 = vmatprep.subr.mxu0 0.0
          %921 = vmatpush1.msra.mxu0 0.0
          %922 = vmatprep.subr.mxu0 0.0
          %923 = vmatpush1.msra.mxu0 0.0
          %924 = vmatprep.subr.mxu0 0.0
          %925 = vmatpush1.msra.mxu0 0.0
          %926 = vmatprep.subr.mxu0 0.0
          %927 = vmatpush1.msra.mxu0 0.0
          %928 = vmatprep.mubr.f32.mxu0 0.0
          %929 = vmatmul.mubr.f32.gmra.mrb[0].mxu0 %v847
          %v930 = vpop.f32.mrb[0].mxu0
          %v931 = vadd.f32 0.0, %v930
          %v932 = vpop.f32.mrb[0].mxu0
          %933 = vdwg.mxu0
          %v934 = vld [vmem:[#allocation11] sm:$0xff]
          %v935 = vld [vmem:[#allocation11 + $0x8] sm:$0xff]
          %v936 = vld [vmem:[#allocation11 + $0x10] sm:$0xff]
          %v937 = vld [vmem:[#allocation11 + $0x18] sm:$0xff]
          %v938 = vld [vmem:[#allocation11 + $0x20] sm:$0xff]
          %v939 = vld [vmem:[#allocation11 + $0x28] sm:$0xff]
          %v940 = vld [vmem:[#allocation11 + $0x30] sm:$0xff]
          %v941 = vld [vmem:[#allocation11 + $0x38] sm:$0xff]
          %v942 = vld [vmem:[#allocation11 + $0x40] sm:$0xff]
          %v943 = vld [vmem:[#allocation11 + $0x48] sm:$0xff]
          %v944 = vld [vmem:[#allocation11 + $0x50] sm:$0xff]
          %v945 = vld [vmem:[#allocation11 + $0x58] sm:$0xff]
          %v946 = vld [vmem:[#allocation11 + $0x60] sm:$0xff]
          %v947 = vld [vmem:[#allocation11 + $0x68] sm:$0xff]
          %v948 = vld [vmem:[#allocation11 + $0x70] sm:$0xff]
          %v949 = vld [vmem:[#allocation11 + $0x78] sm:$0xff]
          %v950 = vld [vmem:[%s7] sm:$0x1]
          %v952 = vlaneseq
          %v953 = vshrl.u32 %v952, 7
          %v954 = vsub.s32 0, %v953
          %v955 = vrot.slane %v950, %v954
          %957 = vmatprep.subr.mxu0 0.0
          %958 = vmatpush1.msra.mxu0 %v934
          %959 = vmatprep.subr.mxu0 0.0
          %960 = vmatpush1.msra.mxu0 %v935
          %961 = vmatprep.subr.mxu0 0.0
          %962 = vmatpush1.msra.mxu0 %v936
          %963 = vmatprep.subr.mxu0 0.0
          %964 = vmatpush1.msra.mxu0 %v937
          %965 = vmatprep.subr.mxu0 0.0
          %966 = vmatpush1.msra.mxu0 %v938
          %967 = vmatprep.subr.mxu0 0.0
          %968 = vmatpush1.msra.mxu0 %v939
          %969 = vmatprep.subr.mxu0 0.0
          %970 = vmatpush1.msra.mxu0 %v940
          %971 = vmatprep.subr.mxu0 0.0
          %972 = vmatpush1.msra.mxu0 %v941
          %973 = vmatprep.subr.mxu0 0.0
          %974 = vmatpush1.msra.mxu0 %v942
          %975 = vmatprep.subr.mxu0 0.0
          %976 = vmatpush1.msra.mxu0 %v943
          %977 = vmatprep.subr.mxu0 0.0
          %978 = vmatpush1.msra.mxu0 %v944
          %979 = vmatprep.subr.mxu0 0.0
          %980 = vmatpush1.msra.mxu0 %v945
          %981 = vmatprep.subr.mxu0 0.0
          %982 = vmatpush1.msra.mxu0 %v946
          %983 = vmatprep.subr.mxu0 0.0
          %984 = vmatpush1.msra.mxu0 %v947
          %985 = vmatprep.subr.mxu0 0.0
          %986 = vmatpush1.msra.mxu0 %v948
          %987 = vmatprep.subr.mxu0 0.0
          %988 = vmatpush1.msra.mxu0 %v949
          %989 = vmatprep.subr.mxu0 0.0
          %990 = vmatpush1.msra.mxu0 0.0
          %991 = vmatprep.subr.mxu0 0.0
          %992 = vmatpush1.msra.mxu0 0.0
          %993 = vmatprep.subr.mxu0 0.0
          %994 = vmatpush1.msra.mxu0 0.0
          %995 = vmatprep.subr.mxu0 0.0
          %996 = vmatpush1.msra.mxu0 0.0
          %997 = vmatprep.subr.mxu0 0.0
          %998 = vmatpush1.msra.mxu0 0.0
          %999 = vmatprep.subr.mxu0 0.0
          %1000 = vmatpush1.msra.mxu0 0.0
          %1001 = vmatprep.subr.mxu0 0.0
          %1002 = vmatpush1.msra.mxu0 0.0
          %1003 = vmatprep.subr.mxu0 0.0
          %1004 = vmatpush1.msra.mxu0 0.0
          %1005 = vmatprep.subr.mxu0 0.0
          %1006 = vmatpush1.msra.mxu0 0.0
          %1007 = vmatprep.subr.mxu0 0.0
          %1008 = vmatpush1.msra.mxu0 0.0
          %1009 = vmatprep.subr.mxu0 0.0
          %1010 = vmatpush1.msra.mxu0 0.0
          %1011 = vmatprep.subr.mxu0 0.0
          %1012 = vmatpush1.msra.mxu0 0.0
          %1013 = vmatprep.subr.mxu0 0.0
          %1014 = vmatpush1.msra.mxu0 0.0
          %1015 = vmatprep.subr.mxu0 0.0
          %1016 = vmatpush1.msra.mxu0 0.0
          %1017 = vmatprep.subr.mxu0 0.0
          %1018 = vmatpush1.msra.mxu0 0.0
          %1019 = vmatprep.subr.mxu0 0.0
          %1020 = vmatpush1.msra.mxu0 0.0
          %1021 = vmatprep.mubr.f32.mxu0 0.0
          %1022 = vmatmul.mubr.f32.gmra.mrb[0].mxu0 %v931
          %v1023 = vpop.f32.mrb[0].mxu0
          %v1024 = vadd.f32 %v955, %v1023
          %v1025 = vpop.f32.mrb[0].mxu0
          %1026 = vdwg.mxu0
          %v1027 = vlaneseq
          %v1028 = vand.u32 %v1027, 127
          %vm1029 = vcmp.lt.s32.totalorder %v1028, 8
          %v1030 = vsel %vm1029, %v1024, -1e+30
          %1031 = vmax.xlane.f32.xlu0 %v1030
          %v1032 = vpop.xlane.xlu0 %1031
          %v1033 = vsub.f32 %v1030, %v1032
          %v1034 = vmul.f32 %v1033, 1.442695
          %v1035 = vpow.pop %v1034
          %1036 = vadd.xlane.f32.xlu0 %v1035
          %v1037 = vpop.xlane.xlu0 %1036
          %v1038 = vlog2.pop %v1037
          %v1039 = vmul.f32 %v1038, 0.6931472
          %v1040 = vsub.f32 %v1033, %v1039
          %1041 = vst [vmem:[#allocation12] sm:$0xff] %v1040
        $region80: #{tpu_custom_call.1} parent=51 // pred_fallthru
          _
        // Predicated region
        $region81: #{tpu_custom_call.1} parent=51 // pred_check
          %p1042 = pneg %p214
        $region82: #{tpu_custom_call.1} parent=51 // pred_check_branch
          %1044 = sbr.rel (%p1042) target = $region84
        $region83: #{tpu_custom_call.1} parent=51 // pred_region
          %s1046 = ssub.s32 128, 128
          %1047 = vsyncadd [#allocation5], %s1046
          %s1049 = sshll.u32 [#allocation12], 4
          %s1050 = int_to_ptr.vmem [resolvable:$true] %s1049
          %1052 = dma.vmem_to_hbm [thread:$0]  %s1050, 128, %s8, [#allocation5]
        $region84: #{tpu_custom_call.1} parent=51 // pred_fallthru
          _
        // Predicated region
        $region85: #{tpu_custom_call.1} parent=51 // pred_check
          %p1053 = pneg %p214
        $region86: #{tpu_custom_call.1} parent=51 // pred_check_branch
          %1055 = sbr.rel (%p1053) target = $region88
        $region87: #{tpu_custom_call.1} parent=51 // pred_region
          %1056 = dma.done [#allocation5], 128
        $region88: #{tpu_custom_call.1} parent=51 // pred_fallthru
          _
      $region52: #{tpu_custom_call.1} parent=5 // pred_fallthru
        _
      %p1057 = scmp.le.s32.totalorder 2, %s18
      // Predicated region
      $region89: #{tpu_custom_call.1} parent=5 // pred_check
        %p1058 = pneg %p1057
      $region90: #{tpu_custom_call.1} parent=5 // pred_check_branch
        %1060 = sbr.rel (%p1058) target = $region92
      $region91: #{tpu_custom_call.1} parent=5 // pred_region
        %s1061 = ssub.s32 %s18, 2
      $region92: #{tpu_custom_call.1} parent=5 // pred_fallthru
        _
    $region6: #{tpu_custom_call.1} parent=1 // loop_footer
      %s22 = sadd.s32 1, %s18
    $region7: #{tpu_custom_call.1} parent=1 // loop_footer_branch
      %17 = sbr.rel target = $region3
    $region8: #{tpu_custom_call.1} parent=1 // loop_exit
      _
    %1062 = vsyncpa [#allocation4], 1
    %s1063 = scalar_lea.sflag [#allocation4], 1
    %1064 = vsyncpa %s1063, 1
    %1065 = vsyncpa [#allocation9], 1
    %1066 = vsyncpa [#allocation5], 1
    %s1067 = scalar_lea.sflag [#allocation5], 1
    %1068 = vsyncpa %s1067, 1
    %1069 = vsyncpa [#allocation6], 1
    %s1070 = scalar_lea.sflag [#allocation6], 1
    %1071 = vsyncpa %s1070, 1

</llo_original>
